<compile_context>
chip_gen: v7x
topology: tpu7x:2x2x1
jax: 0.10.0
libtpu: 0.0.40
codegen_flags: <defaults>
</compile_context>

<pallas_src>
import jax
import jax.numpy as jnp
from jax.experimental import pallas as pl
from jax.experimental.pallas import tpu as pltpu


LANE = 128


def _round_up(n, m):
    return ((n + m - 1) // m) * m


def mlp_kernel(x_ref, w1_ref, w2_ref, w3_ref, w4_ref, b_ref, o_ref):
    """Fused (Linear+ReLU) x3 -> Linear.  BN folded into the following layer;
    Dropout identity in eval.  bf16 MXU dots, f32 accumulate + epilogue."""
    n1 = w1_ref.shape[1]
    n2 = w2_ref.shape[1]
    n3 = w3_ref.shape[1]
    n4 = w4_ref.shape[1]
    n_out = o_ref.shape[1]

    # Cast x to bf16 in-kernel (free VPU work; avoids a wrapper-side XLA pass).
    x = x_ref[...].astype(jnp.bfloat16)

    # Layer 1: Linear + bias + ReLU
    h = jnp.dot(x, w1_ref[...], preferred_element_type=jnp.float32)
    h = jnp.maximum(h + b_ref[0:1, 0:n1], 0.0)
    # Layer 2 (BN1 folded into w2/b2)
    h = jnp.dot(h.astype(jnp.bfloat16), w2_ref[...],
                preferred_element_type=jnp.float32)
    h = jnp.maximum(h + b_ref[1:2, 0:n2], 0.0)
    # Layer 3 (BN2 folded into w3/b3)
    h = jnp.dot(h.astype(jnp.bfloat16), w3_ref[...],
                preferred_element_type=jnp.float32)
    h = jnp.maximum(h + b_ref[2:3, 0:n3], 0.0)
    # Output layer (BN3 folded into w4/b4).  w4 is lane-padded to 128 for the
    # MXU, but only the real `n_out` columns are stored back to HBM.
    out = jnp.dot(h.astype(jnp.bfloat16), w4_ref[...],
                  preferred_element_type=jnp.float32)
    out = out + b_ref[3:4, 0:n4]
    o_ref[...] = out[:, :n_out].astype(o_ref.dtype)


def prepare_kernel_params(params):
    """One-time parameter prep (run at parameter-load time, NOT per forward):
    fold BN (scale, shift) into the following Linear, pad the output layer's
    weights/bias to a 128-lane multiple (compute only), pack the four bias
    rows into a single (4, 256) operand, and pre-cast matmul weights to bf16.

    Returns (prepared_tuple, out_dim)."""
    w1 = params["w1"]
    b1 = params["b1"].reshape(-1)

    w2 = params["s1"].reshape(-1, 1) * params["w2"]
    b2 = (params["t1"].reshape(1, -1) @ params["w2"]).reshape(-1) \
        + params["b2"].reshape(-1)

    w3 = params["s2"].reshape(-1, 1) * params["w3"]
    b3 = (params["t2"].reshape(1, -1) @ params["w3"]).reshape(-1) \
        + params["b3"].reshape(-1)

    w4 = params["s3"].reshape(-1, 1) * params["w4"]
    b4 = (params["t3"].reshape(1, -1) @ params["w4"]).reshape(-1) \
        + params["b4"].reshape(-1)

    out_dim = w4.shape[1]
    out_pad = _round_up(out_dim, LANE)
    w4 = jnp.pad(w4, ((0, 0), (0, out_pad - out_dim)))
    b4 = jnp.pad(b4, (0, out_pad - out_dim))

    bias_w = max(w1.shape[1], w2.shape[1], w3.shape[1], out_pad)
    biases = jnp.zeros((4, bias_w), jnp.float32)
    biases = biases.at[0, :b1.shape[0]].set(b1)
    biases = biases.at[1, :b2.shape[0]].set(b2)
    biases = biases.at[2, :b3.shape[0]].set(b3)
    biases = biases.at[3, :b4.shape[0]].set(b4)

    bf16 = lambda a: a.astype(jnp.bfloat16)
    prepared = (bf16(w1), bf16(w2), bf16(w3), bf16(w4), biases)
    return prepared, out_dim


def custom_nn_forward(x, prepared, out_dim, *, tb=256):
    """Eval-mode forward of CustomNN.

    x: (B, input_dim) f32;  prepared: output of prepare_kernel_params (cached
    at load time);  out_dim: real output width (HBM output is un-padded)."""
    w1, w2, w3, w4, biases = prepared
    B, in_dim = x.shape

    if B <= tb:
        # Small batch: single grid-less invocation, everything VMEM resident.
        return pl.pallas_call(
            mlp_kernel,
            out_shape=jax.ShapeDtypeStruct((B, out_dim), jnp.float32),
        )(x, w1, w2, w3, w4, biases)

    # Batch-tiled path: tile rows of x/out only; weights/biases use a constant
    # block index (stay VMEM resident, single-buffered).  Pallas clips the
    # partial last block, so no jnp.pad / out[:B] round trips are needed.
    nb = pl.cdiv(B, tb)

    def const_spec(shape):
        return pl.BlockSpec(shape, lambda i: (0, 0),
                            pipeline_mode=pl.Buffered(1))

    return pl.pallas_call(
        mlp_kernel,
        out_shape=jax.ShapeDtypeStruct((B, out_dim), jnp.float32),
        grid=(nb,),
        in_specs=[
            pl.BlockSpec((tb, in_dim), lambda i: (i, 0)),
            const_spec(w1.shape),
            const_spec(w2.shape),
            const_spec(w3.shape),
            const_spec(w4.shape),
            const_spec(biases.shape),
        ],
        out_specs=pl.BlockSpec((tb, out_dim), lambda i: (i, 0)),
        compiler_params=pltpu.CompilerParams(
            dimension_semantics=("parallel",)),
    )(x, w1, w2, w3, w4, biases)


def init_params(key, input_dim, output_dim):
    """Deterministic params mirroring the module.  Linear weights stored
    (in, out); BatchNorm1d running stats expressed as (scale, shift)."""
    dims = [input_dim, 256, 128, 64, output_dim]
    keys = jax.random.split(key, 32)
    ki = iter(keys)
    params = {}
    eps = 1e-5
    for layer in range(1, 5):
        fan_in, fan_out = dims[layer - 1], dims[layer]
        bound = 1.0 / jnp.sqrt(fan_in)
        params[f"w{layer}"] = jax.random.uniform(
            next(ki), (fan_in, fan_out), jnp.float32, minval=-bound, maxval=bound)
        params[f"b{layer}"] = jax.random.uniform(
            next(ki), (1, fan_out), jnp.float32, minval=-bound, maxval=bound)
        if layer <= 3:  # BatchNorm1d after the first three Linear+ReLU blocks
            gamma = 1.0 + 0.1 * jax.random.normal(next(ki), (1, fan_out), jnp.float32)
            beta = 0.1 * jax.random.normal(next(ki), (1, fan_out), jnp.float32)
            running_mean = 0.05 * jax.random.normal(next(ki), (1, fan_out), jnp.float32)
            running_var = jnp.abs(
                1.0 + 0.1 * jax.random.normal(next(ki), (1, fan_out), jnp.float32))
            scale = gamma / jnp.sqrt(running_var + eps)
            params[f"s{layer}"] = scale
            params[f"t{layer}"] = beta - running_mean * scale
    return params


def reference_forward(x, params):
    """Pure-JAX f32 reference using the *unfolded* parameters."""
    h = x
    for layer in range(1, 4):
        h = jnp.maximum(h @ params[f"w{layer}"] + params[f"b{layer}"], 0.0)
        h = h * params[f"s{layer}"] + params[f"t{layer}"]
    return h @ params["w4"] + params["b4"]


if __name__ == "__main__":
    key = jax.random.PRNGKey(0)
    k_x, k_p, k_x2 = jax.random.split(key, 3)

    batch, input_dim, output_dim = 8, 32, 16
    params = init_params(k_p, input_dim, output_dim)

    # Parameter prep (BN folding, bias packing, bf16 casts) runs ONCE here,
    # not per forward call.
    prepared, out_dim = prepare_kernel_params(params)
    prepared = jax.block_until_ready(prepared)

    # Small-batch (grid-less) path.
    x = jax.random.normal(k_x, (batch, input_dim), jnp.float32)
    out = jax.block_until_ready(custom_nn_forward(x, prepared, out_dim))
    ref = reference_forward(x, params)
    assert out.shape == (batch, output_dim)
    assert jnp.allclose(out, ref, atol=5e-2, rtol=5e-2), \
        float(jnp.max(jnp.abs(out - ref)))

    # Batch-tiled path (grid of 4 parallel steps, partial last block clipped
    # by Pallas — exercises the megacore-friendly tiling).
    big_batch = 1000
    x2 = jax.random.normal(k_x2, (big_batch, input_dim), jnp.float32)
    out2 = jax.block_until_ready(custom_nn_forward(x2, prepared, out_dim, tb=256))
    ref2 = reference_forward(x2, params)
    assert out2.shape == (big_batch, output_dim)
    assert jnp.allclose(out2, ref2, atol=5e-2, rtol=5e-2), \
        float(jnp.max(jnp.abs(out2 - ref2)))

    print("KERNEL_OK")
</pallas_src>

<mosaic_0001>
module attributes {stable_mosaic.version = 11 : i64} {
  func.func @mlp_kernel(%arg0: memref<8x32xf32, #tpu.memory_space<vmem>>, %arg1: memref<32x256xbf16, #tpu.memory_space<vmem>>, %arg2: memref<256x128xbf16, #tpu.memory_space<vmem>>, %arg3: memref<128x64xbf16, #tpu.memory_space<vmem>>, %arg4: memref<64x128xbf16, #tpu.memory_space<vmem>>, %arg5: memref<4x256xf32, #tpu.memory_space<vmem>>, %arg6: memref<8x16xf32, #tpu.memory_space<vmem>>) attributes {dimension_semantics = [], scalar_prefetch = 0 : i64, scratch_operands = 0 : i64, tpu.core_type = #tpu.core_type<tc>} {
    %c0 = arith.constant 0 : index
    %c0_0 = arith.constant 0 : index
    %0 = vector.load %arg0[%c0, %c0_0] : memref<8x32xf32, #tpu.memory_space<vmem>>, vector<8x32xf32>
    %1 = arith.truncf %0 : vector<8x32xf32> to vector<8x32xbf16>
    %c0_1 = arith.constant 0 : index
    %c0_2 = arith.constant 0 : index
    %2 = vector.load %arg1[%c0_1, %c0_2] : memref<32x256xbf16, #tpu.memory_space<vmem>>, vector<32x256xbf16>
    %cst = arith.constant dense<0.000000e+00> : vector<8x256xf32>
    %3 = tpu.matmul %1, %2, %cst {dimension_numbers = #tpu.dot_dimension_numbers<[1], [0], [0], [1], [0, 0, 1, 1], [], []>} : vector<8x32xbf16>, vector<32x256xbf16>, vector<8x256xf32> -> vector<8x256xf32>
    %c0_3 = arith.constant 0 : index
    %c0_4 = arith.constant 0 : index
    %4 = vector.load %arg5[%c0_3, %c0_4] : memref<4x256xf32, #tpu.memory_space<vmem>>, vector<1x256xf32>
    %5 = vector.broadcast %4 : vector<1x256xf32> to vector<8x256xf32>
    %6 = arith.addf %3, %5 : vector<8x256xf32>
    %cst_5 = arith.constant 0.000000e+00 : f32
    %7 = vector.broadcast %cst_5 : f32 to vector<8x256xf32>
    %8 = arith.maximumf %6, %7 : vector<8x256xf32>
    %9 = arith.truncf %8 : vector<8x256xf32> to vector<8x256xbf16>
    %c0_6 = arith.constant 0 : index
    %c0_7 = arith.constant 0 : index
    %10 = vector.load %arg2[%c0_6, %c0_7] : memref<256x128xbf16, #tpu.memory_space<vmem>>, vector<256x128xbf16>
    %cst_8 = arith.constant dense<0.000000e+00> : vector<8x128xf32>
    %11 = tpu.matmul %9, %10, %cst_8 {dimension_numbers = #tpu.dot_dimension_numbers<[1], [0], [0], [1], [0, 0, 1, 1], [], []>} : vector<8x256xbf16>, vector<256x128xbf16>, vector<8x128xf32> -> vector<8x128xf32>
    %c1 = arith.constant 1 : index
    %c0_9 = arith.constant 0 : index
    %12 = vector.load %arg5[%c1, %c0_9] : memref<4x256xf32, #tpu.memory_space<vmem>>, vector<1x128xf32>
    %13 = vector.broadcast %12 : vector<1x128xf32> to vector<8x128xf32>
    %14 = arith.addf %11, %13 : vector<8x128xf32>
    %cst_10 = arith.constant 0.000000e+00 : f32
    %15 = vector.broadcast %cst_10 : f32 to vector<8x128xf32>
    %16 = arith.maximumf %14, %15 : vector<8x128xf32>
    %17 = arith.truncf %16 : vector<8x128xf32> to vector<8x128xbf16>
    %c0_11 = arith.constant 0 : index
    %c0_12 = arith.constant 0 : index
    %18 = vector.load %arg3[%c0_11, %c0_12] : memref<128x64xbf16, #tpu.memory_space<vmem>>, vector<128x64xbf16>
    %cst_13 = arith.constant dense<0.000000e+00> : vector<8x64xf32>
    %19 = tpu.matmul %17, %18, %cst_13 {dimension_numbers = #tpu.dot_dimension_numbers<[1], [0], [0], [1], [0, 0, 1, 1], [], []>} : vector<8x128xbf16>, vector<128x64xbf16>, vector<8x64xf32> -> vector<8x64xf32>
    %c2 = arith.constant 2 : index
    %c0_14 = arith.constant 0 : index
    %20 = vector.load %arg5[%c2, %c0_14] : memref<4x256xf32, #tpu.memory_space<vmem>>, vector<1x64xf32>
    %21 = vector.broadcast %20 : vector<1x64xf32> to vector<8x64xf32>
    %22 = arith.addf %19, %21 : vector<8x64xf32>
    %cst_15 = arith.constant 0.000000e+00 : f32
    %23 = vector.broadcast %cst_15 : f32 to vector<8x64xf32>
    %24 = arith.maximumf %22, %23 : vector<8x64xf32>
    %25 = arith.truncf %24 : vector<8x64xf32> to vector<8x64xbf16>
    %c0_16 = arith.constant 0 : index
    %c0_17 = arith.constant 0 : index
    %26 = vector.load %arg4[%c0_16, %c0_17] : memref<64x128xbf16, #tpu.memory_space<vmem>>, vector<64x128xbf16>
    %cst_18 = arith.constant dense<0.000000e+00> : vector<8x128xf32>
    %27 = tpu.matmul %25, %26, %cst_18 {dimension_numbers = #tpu.dot_dimension_numbers<[1], [0], [0], [1], [0, 0, 1, 1], [], []>} : vector<8x64xbf16>, vector<64x128xbf16>, vector<8x128xf32> -> vector<8x128xf32>
    %c3 = arith.constant 3 : index
    %c0_19 = arith.constant 0 : index
    %28 = vector.load %arg5[%c3, %c0_19] : memref<4x256xf32, #tpu.memory_space<vmem>>, vector<1x128xf32>
    %29 = vector.broadcast %28 : vector<1x128xf32> to vector<8x128xf32>
    %30 = arith.addf %27, %29 : vector<8x128xf32>
    %31 = vector.extract_strided_slice %30 {offsets = [0, 0], sizes = [8, 16], strides = [1, 1]} : vector<8x128xf32> to vector<8x16xf32>
    %c0_20 = arith.constant 0 : index
    %c0_21 = arith.constant 0 : index
    %32 = vector.load %arg6[%c0_20, %c0_21] : memref<8x16xf32, #tpu.memory_space<vmem>>, vector<8x16xf32>
    tpu.vector_store %arg6[%c0_20, %c0_21], %31 {strides = array<i32>} : memref<8x16xf32, #tpu.memory_space<vmem>>, vector<8x16xf32>,
    return
  }
}

</mosaic_0001>

<llo_original>
// kernel: tpu_custom_call.1
$region0: #{tpu_custom_call.1}
  #allocation0 [shape = 'u32[]', space=smem, size = 0x4, offset = 0x4, fixed_abs, tag = 'smem constant byte address 0x4 - core index']
  #allocation1 [shape = 'u32[144,128]{1,0:T(1,128)}', space=vmem, size = 0x12000, scoped, tag = 'internal scratch']
  %s0 = inlined_call_operand.vmem [shape: f32[8,32], index: 0, kind: input, shape index: {}]
  %s1 = inlined_call_operand.vmem [shape: bf16[32,256], index: 1, kind: input, shape index: {}]
  %s2 = inlined_call_operand.hbm [shape: bf16[256,128], index: 2, kind: input, shape index: {}]
  %s3 = inlined_call_operand.vmem [shape: bf16[128,64], index: 3, kind: input, shape index: {}]
  %s4 = inlined_call_operand.vmem [shape: bf16[64,128], index: 4, kind: input, shape index: {}]
  %s5 = inlined_call_operand.vmem [shape: f32[4,256], index: 5, kind: input, shape index: {}]
  %s6 = inlined_call_operand.hbm [shape: f32[8,16], index: 6, kind: output, shape index: {}]
  %s7 = sld [smem:[#allocation0]]
  $region38: #{tpu_custom_call.1} parent=0
    _
  %s9 = ssub.s32 1, %s7
  %s10 = scalar_select 0, %s9, %s7
  $region1: #{tpu_custom_call.1} parent=0
    #allocation2 [shape = 'u8[65536]{0}', space=vmem, size = 0x10000, scoped, tag = 'input window, operand 2, single buffered']
    #allocation3 [shape = 's32[1]{0}', space=sflag, size = 0x4, scoped, tag = 'scoped memory for tpu_custom_call.1']
    #allocation4 [shape = 's32[1]{0}', space=sflag, size = 0x4, scoped, tag = 'scoped memory for tpu_custom_call.1']
    #allocation5 [shape = 'u8[4096]{0}', space=vmem, size = 0x1000, scoped, tag = 'output window, operand 0, single buffered']
    %11 = vsyncpa [#allocation3], 0
    %12 = vsyncpa [#allocation4], 0
    // Predicated region
    $region2: #{tpu_custom_call.1} parent=1 // pred_check
      _
    $region3: #{tpu_custom_call.1} parent=1 // pred_check_branch
      %14 = sbr.rel (0) target = $region5
    $region4: #{tpu_custom_call.1} parent=1 // pred_region
      _
    $region5: #{tpu_custom_call.1} parent=1 // pred_fallthru
      _
    // Predicated region
    $region6: #{tpu_custom_call.1} parent=1 // pred_check
      _
    $region7: #{tpu_custom_call.1} parent=1 // pred_check_branch
      %16 = sbr.rel (0) target = $region9
    $region8: #{tpu_custom_call.1} parent=1 // pred_region
      _
    $region9: #{tpu_custom_call.1} parent=1 // pred_fallthru
      _
    // Predicated region
    $region10: #{tpu_custom_call.1} parent=1 // pred_check
      _
    $region11: #{tpu_custom_call.1} parent=1 // pred_check_branch
      %18 = sbr.rel (0) target = $region13
    $region12: #{tpu_custom_call.1} parent=1 // pred_region
      %s20 = ssub.s32 2048, 2048
      %21 = vsyncadd [#allocation3], %s20
      %s22 = sshll.u32 [#allocation2], 4
      %s23 = int_to_ptr.vmem [resolvable:$true] %s22
      %28 = dma.hbm_to_vmem [thread:$0]  %s2, 2048, %s23, [#allocation3], 64, 64, 4
    $region13: #{tpu_custom_call.1} parent=1 // pred_fallthru
      _
    // Predicated region
    $region14: #{tpu_custom_call.1} parent=1 // pred_check
      _
    $region15: #{tpu_custom_call.1} parent=1 // pred_check_branch
      %30 = sbr.rel (0) target = $region17
    $region16: #{tpu_custom_call.1} parent=1 // pred_region
      _
    $region17: #{tpu_custom_call.1} parent=1 // pred_fallthru
      _
    // Predicated region
    $region18: #{tpu_custom_call.1} parent=1 // pred_check
      _
    $region19: #{tpu_custom_call.1} parent=1 // pred_check_branch
      %32 = sbr.rel (0) target = $region21
    $region20: #{tpu_custom_call.1} parent=1 // pred_region
      _
    $region21: #{tpu_custom_call.1} parent=1 // pred_fallthru
      _
    // Predicated region
    $region22: #{tpu_custom_call.1} parent=1 // pred_check
      _
    $region23: #{tpu_custom_call.1} parent=1 // pred_check_branch
      %34 = sbr.rel (0) target = $region25
    $region24: #{tpu_custom_call.1} parent=1 // pred_region
      _
    $region25: #{tpu_custom_call.1} parent=1 // pred_fallthru
      _
    // Predicated region
    $region26: #{tpu_custom_call.1} parent=1 // pred_check
      _
    $region27: #{tpu_custom_call.1} parent=1 // pred_check_branch
      %36 = sbr.rel (0) target = $region29
    $region28: #{tpu_custom_call.1} parent=1 // pred_region
      %37 = dma.done [#allocation3], 2048
    $region29: #{tpu_custom_call.1} parent=1 // pred_fallthru
      _
    %v39 = vld [vmem:[%s0] sm:$0xff]
    %v40 = vpack.c.bf16 %v39, %v39
    %v41 = vld [vmem:[%s1] sm:$0xff]
    %v42 = vld [vmem:[%s1 + $0x8] sm:$0xff]
    %v43 = vld [vmem:[%s1 + $0x10] sm:$0xff]
    %v44 = vld [vmem:[%s1 + $0x18] sm:$0xff]
    %v45 = vld [vmem:[%s5] ss:$4 sm:$0x3]
    %v47 = vlaneseq
    %v48 = vshrl.u32 %v47, 7
    %v49 = vsub.s32 0, %v48
    %v50 = vrot.slane %v45, %v49
    %v51 = vlaneseq
    %v52 = vshrl.u32 %v51, 7
    %v53 = vsub.s32 1, %v52
    %v54 = vrot.slane %v45, %v53
    %v61 = vunpack.c.l.b16 %v41
    %v62 = vunpack.c.h.b16 %v41
    %v63 = vunpack.c.l.b16 %v42
    %v64 = vunpack.c.h.b16 %v42
    %v65 = vunpack.c.l.b16 %v43
    %v66 = vunpack.c.h.b16 %v43
    %v67 = vunpack.c.l.b16 %v44
    %v68 = vunpack.c.h.b16 %v44
    %v69 = vpack.c.b16 %v63, %v61
    %v70 = vpack.c.b16 %v64, %v62
    %v71 = vpack.c.b16 %v67, %v65
    %v72 = vpack.c.b16 %v68, %v66
    %vm77 = vcmask 261120
    %v79 = vsel %vm77, %v40, 0
    %81 = vmatprep.subr.bf16.mxu0 %v70
    %82 = vmatpush1.bf16.msra.mxu0 %v69
    %83 = vmatprep.subr.bf16.mxu0 %v72
    %84 = vmatpush1.bf16.msra.mxu0 %v71
    %85 = vmatprep.subr.bf16.mxu0 0
    %86 = vmatpush1.bf16.msra.mxu0 0
    %87 = vmatprep.subr.bf16.mxu0 0
    %88 = vmatpush1.bf16.msra.mxu0 0
    %89 = vmatprep.subr.bf16.mxu0 0
    %90 = vmatpush1.bf16.msra.mxu0 0
    %91 = vmatprep.subr.bf16.mxu0 0
    %92 = vmatpush1.bf16.msra.mxu0 0
    %93 = vmatprep.subr.bf16.mxu0 0
    %94 = vmatpush1.bf16.msra.mxu0 0
    %95 = vmatprep.subr.bf16.mxu0 0
    %96 = vmatpush1.bf16.msra.mxu0 0
    %97 = vmatprep.subr.bf16.mxu0 0
    %98 = vmatpush1.bf16.msra.mxu0 0
    %99 = vmatprep.subr.bf16.mxu0 0
    %100 = vmatpush1.bf16.msra.mxu0 0
    %101 = vmatprep.subr.bf16.mxu0 0
    %102 = vmatpush1.bf16.msra.mxu0 0
    %103 = vmatprep.subr.bf16.mxu0 0
    %104 = vmatpush1.bf16.msra.mxu0 0
    %105 = vmatprep.subr.bf16.mxu0 0
    %106 = vmatpush1.bf16.msra.mxu0 0
    %107 = vmatprep.subr.bf16.mxu0 0
    %108 = vmatpush1.bf16.msra.mxu0 0
    %109 = vmatprep.subr.bf16.mxu0 0
    %110 = vmatpush1.bf16.msra.mxu0 0
    %111 = vmatprep.subr.bf16.mxu0 0
    %112 = vmatpush1.bf16.msra.mxu0 0
    %113 = vmatprep.mubr.bf16.mxu0 0
    %114 = vmatmul.mubr.bf16.gmra.mrb[0].mxu0 %v79
    %v115 = vpop.f32.mrb[0].mxu0
    %v116 = vadd.f32 %v50, %v115
    %v117 = vpop.f32.mrb[0].mxu0
    %v118 = vadd.f32 %v54, %v117
    %v119 = vpop.f32.mrb[0].mxu0
    %v120 = vpop.f32.mrb[0].mxu0
    %121 = vdwg.mxu0
    %v122 = vmax.f32 %v116, 0.0
    %v123 = vmax.f32 %v118, 0.0
    %v124 = vpack.c.bf16 %v122, %v122
    %v125 = vpack.c.bf16 %v123, %v123
    %v126 = vld [vmem:[#allocation2] sm:$0xf]
    %v127 = vld [vmem:[#allocation2 + $0x4] sm:$0xf]
    %v128 = vld [vmem:[#allocation2 + $0x8] sm:$0xf]
    %v129 = vld [vmem:[#allocation2 + $0xc] sm:$0xf]
    %v130 = vld [vmem:[#allocation2 + $0x10] sm:$0xf]
    %v131 = vld [vmem:[#allocation2 + $0x14] sm:$0xf]
    %v132 = vld [vmem:[#allocation2 + $0x18] sm:$0xf]
    %v133 = vld [vmem:[#allocation2 + $0x1c] sm:$0xf]
    %v134 = vld [vmem:[#allocation2 + $0x20] sm:$0xf]
    %v135 = vld [vmem:[#allocation2 + $0x24] sm:$0xf]
    %v136 = vld [vmem:[#allocation2 + $0x28] sm:$0xf]
    %v137 = vld [vmem:[#allocation2 + $0x2c] sm:$0xf]
    %v138 = vld [vmem:[#allocation2 + $0x30] sm:$0xf]
    %v139 = vld [vmem:[#allocation2 + $0x34] sm:$0xf]
    %v140 = vld [vmem:[#allocation2 + $0x38] sm:$0xf]
    %v141 = vld [vmem:[#allocation2 + $0x3c] sm:$0xf]
    %v142 = vld [vmem:[#allocation2 + $0x40] sm:$0xf]
    %v143 = vld [vmem:[#allocation2 + $0x44] sm:$0xf]
    %v144 = vld [vmem:[#allocation2 + $0x48] sm:$0xf]
    %v145 = vld [vmem:[#allocation2 + $0x4c] sm:$0xf]
    %v146 = vld [vmem:[#allocation2 + $0x50] sm:$0xf]
    %v147 = vld [vmem:[#allocation2 + $0x54] sm:$0xf]
    %v148 = vld [vmem:[#allocation2 + $0x58] sm:$0xf]
    %v149 = vld [vmem:[#allocation2 + $0x5c] sm:$0xf]
    %v150 = vld [vmem:[#allocation2 + $0x60] sm:$0xf]
    %v151 = vld [vmem:[#allocation2 + $0x64] sm:$0xf]
    %v152 = vld [vmem:[#allocation2 + $0x68] sm:$0xf]
    %v153 = vld [vmem:[#allocation2 + $0x6c] sm:$0xf]
    %v154 = vld [vmem:[#allocation2 + $0x70] sm:$0xf]
    %v155 = vld [vmem:[#allocation2 + $0x74] sm:$0xf]
    %v156 = vld [vmem:[#allocation2 + $0x78] sm:$0xf]
    %v157 = vld [vmem:[#allocation2 + $0x7c] sm:$0xf]
    %v158 = vld [vmem:[%s5 + $0x1] sm:$0x1]
    %v159 = vlaneseq
    %v160 = vshrl.u32 %v159, 7
    %v161 = vsub.s32 0, %v160
    %v162 = vrot.slane %v158, %v161
    %v195 = vunpack.c.l.b16 %v126
    %v196 = vunpack.c.l.b16 %v127
    %v197 = vunpack.c.l.b16 %v128
    %v198 = vunpack.c.l.b16 %v129
    %v199 = vunpack.c.l.b16 %v130
    %v200 = vunpack.c.l.b16 %v131
    %v201 = vunpack.c.l.b16 %v132
    %v202 = vunpack.c.l.b16 %v133
    %v203 = vunpack.c.l.b16 %v134
    %v204 = vunpack.c.l.b16 %v135
    %v205 = vunpack.c.l.b16 %v136
    %v206 = vunpack.c.l.b16 %v137
    %v207 = vunpack.c.l.b16 %v138
    %v208 = vunpack.c.l.b16 %v139
    %v209 = vunpack.c.l.b16 %v140
    %v210 = vunpack.c.l.b16 %v141
    %v211 = vunpack.c.l.b16 %v142
    %v212 = vunpack.c.l.b16 %v143
    %v213 = vunpack.c.l.b16 %v144
    %v214 = vunpack.c.l.b16 %v145
    %v215 = vunpack.c.l.b16 %v146
    %v216 = vunpack.c.l.b16 %v147
    %v217 = vunpack.c.l.b16 %v148
    %v218 = vunpack.c.l.b16 %v149
    %v219 = vunpack.c.l.b16 %v150
    %v220 = vunpack.c.l.b16 %v151
    %v221 = vunpack.c.l.b16 %v152
    %v222 = vunpack.c.l.b16 %v153
    %v223 = vunpack.c.l.b16 %v154
    %v224 = vunpack.c.l.b16 %v155
    %v225 = vunpack.c.l.b16 %v156
    %v226 = vunpack.c.l.b16 %v157
    %v227 = vpack.c.b16 %v196, %v195
    %v228 = vpack.c.b16 %v198, %v197
    %v229 = vpack.c.b16 %v200, %v199
    %v230 = vpack.c.b16 %v202, %v201
    %v231 = vpack.c.b16 %v204, %v203
    %v232 = vpack.c.b16 %v206, %v205
    %v233 = vpack.c.b16 %v208, %v207
    %v234 = vpack.c.b16 %v210, %v209
    %v235 = vpack.c.b16 %v212, %v211
    %v236 = vpack.c.b16 %v214, %v213
    %v237 = vpack.c.b16 %v216, %v215
    %v238 = vpack.c.b16 %v218, %v217
    %v239 = vpack.c.b16 %v220, %v219
    %v240 = vpack.c.b16 %v222, %v221
    %v241 = vpack.c.b16 %v224, %v223
    %v242 = vpack.c.b16 %v226, %v225
    %259 = vmatprep.subr.bf16.mxu0 0
    %260 = vmatpush1.bf16.msra.mxu0 %v227
    %261 = vmatprep.subr.bf16.mxu0 0
    %262 = vmatpush1.bf16.msra.mxu0 %v228
    %263 = vmatprep.subr.bf16.mxu0 0
    %264 = vmatpush1.bf16.msra.mxu0 %v229
    %265 = vmatprep.subr.bf16.mxu0 0
    %266 = vmatpush1.bf16.msra.mxu0 %v230
    %267 = vmatprep.subr.bf16.mxu0 0
    %268 = vmatpush1.bf16.msra.mxu0 %v231
    %269 = vmatprep.subr.bf16.mxu0 0
    %270 = vmatpush1.bf16.msra.mxu0 %v232
    %271 = vmatprep.subr.bf16.mxu0 0
    %272 = vmatpush1.bf16.msra.mxu0 %v233
    %273 = vmatprep.subr.bf16.mxu0 0
    %274 = vmatpush1.bf16.msra.mxu0 %v234
    %275 = vmatprep.subr.bf16.mxu0 0
    %276 = vmatpush1.bf16.msra.mxu0 %v235
    %277 = vmatprep.subr.bf16.mxu0 0
    %278 = vmatpush1.bf16.msra.mxu0 %v236
    %279 = vmatprep.subr.bf16.mxu0 0
    %280 = vmatpush1.bf16.msra.mxu0 %v237
    %281 = vmatprep.subr.bf16.mxu0 0
    %282 = vmatpush1.bf16.msra.mxu0 %v238
    %283 = vmatprep.subr.bf16.mxu0 0
    %284 = vmatpush1.bf16.msra.mxu0 %v239
    %285 = vmatprep.subr.bf16.mxu0 0
    %286 = vmatpush1.bf16.msra.mxu0 %v240
    %287 = vmatprep.subr.bf16.mxu0 0
    %288 = vmatpush1.bf16.msra.mxu0 %v241
    %289 = vmatprep.subr.bf16.mxu0 0
    %290 = vmatpush1.bf16.msra.mxu0 %v242
    %291 = vmatprep.mubr.bf16.mxu0 %v125
    %292 = vmatmul.mubr.bf16.gmra.mrb[0].mxu0 %v124
    %v293 = vpop.f32.mrb[0].mxu0
    %v294 = vadd.f32 %v162, %v293
    %v295 = vpop.f32.mrb[0].mxu0
    %v296 = vpop.f32.mrb[0].mxu0
    %v297 = vpop.f32.mrb[0].mxu0
    %298 = vdwg.mxu0
    %v299 = vmax.f32 %v294, 0.0
    %v300 = vpack.c.bf16 %v299, %v299
    %v301 = vld [vmem:[%s3] sm:$0xf]
    %v302 = vld [vmem:[%s3 + $0x4] sm:$0xf]
    %v303 = vld [vmem:[%s3 + $0x8] sm:$0xf]
    %v304 = vld [vmem:[%s3 + $0xc] sm:$0xf]
    %v305 = vld [vmem:[%s3 + $0x10] sm:$0xf]
    %v306 = vld [vmem:[%s3 + $0x14] sm:$0xf]
    %v307 = vld [vmem:[%s3 + $0x18] sm:$0xf]
    %v308 = vld [vmem:[%s3 + $0x1c] sm:$0xf]
    %v309 = vld [vmem:[%s3 + $0x20] sm:$0xf]
    %v310 = vld [vmem:[%s3 + $0x24] sm:$0xf]
    %v311 = vld [vmem:[%s3 + $0x28] sm:$0xf]
    %v312 = vld [vmem:[%s3 + $0x2c] sm:$0xf]
    %v313 = vld [vmem:[%s3 + $0x30] sm:$0xf]
    %v314 = vld [vmem:[%s3 + $0x34] sm:$0xf]
    %v315 = vld [vmem:[%s3 + $0x38] sm:$0xf]
    %v316 = vld [vmem:[%s3 + $0x3c] sm:$0xf]
    %v317 = vld [vmem:[%s5 + $0x2] sm:$0x1]
    %v318 = vlaneseq
    %v319 = vshrl.u32 %v318, 7
    %v320 = vsub.s32 0, %v319
    %v321 = vrot.slane %v317, %v320
    %v338 = vunpack.c.l.b16 %v301
    %v339 = vunpack.c.l.b16 %v302
    %v340 = vunpack.c.l.b16 %v303
    %v341 = vunpack.c.l.b16 %v304
    %v342 = vunpack.c.l.b16 %v305
    %v343 = vunpack.c.l.b16 %v306
    %v344 = vunpack.c.l.b16 %v307
    %v345 = vunpack.c.l.b16 %v308
    %v346 = vunpack.c.l.b16 %v309
    %v347 = vunpack.c.l.b16 %v310
    %v348 = vunpack.c.l.b16 %v311
    %v349 = vunpack.c.l.b16 %v312
    %v350 = vunpack.c.l.b16 %v313
    %v351 = vunpack.c.l.b16 %v314
    %v352 = vunpack.c.l.b16 %v315
    %v353 = vunpack.c.l.b16 %v316
    %v354 = vpack.c.b16 %v339, %v338
    %v355 = vpack.c.b16 %v341, %v340
    %v356 = vpack.c.b16 %v343, %v342
    %v357 = vpack.c.b16 %v345, %v344
    %v358 = vpack.c.b16 %v347, %v346
    %v359 = vpack.c.b16 %v349, %v348
    %v360 = vpack.c.b16 %v351, %v350
    %v361 = vpack.c.b16 %v353, %v352
    %370 = vmatprep.subr.bf16.mxu0 0
    %371 = vmatpush1.bf16.msra.mxu0 %v354
    %372 = vmatprep.subr.bf16.mxu0 0
    %373 = vmatpush1.bf16.msra.mxu0 %v355
    %374 = vmatprep.subr.bf16.mxu0 0
    %375 = vmatpush1.bf16.msra.mxu0 %v356
    %376 = vmatprep.subr.bf16.mxu0 0
    %377 = vmatpush1.bf16.msra.mxu0 %v357
    %378 = vmatprep.subr.bf16.mxu0 0
    %379 = vmatpush1.bf16.msra.mxu0 %v358
    %380 = vmatprep.subr.bf16.mxu0 0
    %381 = vmatpush1.bf16.msra.mxu0 %v359
    %382 = vmatprep.subr.bf16.mxu0 0
    %383 = vmatpush1.bf16.msra.mxu0 %v360
    %384 = vmatprep.subr.bf16.mxu0 0
    %385 = vmatpush1.bf16.msra.mxu0 %v361
    %386 = vmatprep.subr.bf16.mxu0 0
    %387 = vmatpush1.bf16.msra.mxu0 0
    %388 = vmatprep.subr.bf16.mxu0 0
    %389 = vmatpush1.bf16.msra.mxu0 0
    %390 = vmatprep.subr.bf16.mxu0 0
    %391 = vmatpush1.bf16.msra.mxu0 0
    %392 = vmatprep.subr.bf16.mxu0 0
    %393 = vmatpush1.bf16.msra.mxu0 0
    %394 = vmatprep.subr.bf16.mxu0 0
    %395 = vmatpush1.bf16.msra.mxu0 0
    %396 = vmatprep.subr.bf16.mxu0 0
    %397 = vmatpush1.bf16.msra.mxu0 0
    %398 = vmatprep.subr.bf16.mxu0 0
    %399 = vmatpush1.bf16.msra.mxu0 0
    %400 = vmatprep.subr.bf16.mxu0 0
    %401 = vmatpush1.bf16.msra.mxu0 0
    %402 = vmatprep.mubr.bf16.mxu0 0
    %403 = vmatmul.mubr.bf16.gmra.mrb[0].mxu0 %v300
    %v404 = vpop.f32.mrb[0].mxu0
    %v405 = vadd.f32 %v321, %v404
    %v406 = vpop.f32.mrb[0].mxu0
    %v407 = vpop.f32.mrb[0].mxu0
    %v408 = vpop.f32.mrb[0].mxu0
    %409 = vdwg.mxu0
    %v410 = vmax.f32 %v405, 0.0
    %v411 = vpack.c.bf16 %v410, %v410
    %v412 = vld [vmem:[%s4] sm:$0xf]
    %v413 = vld [vmem:[%s4 + $0x4] sm:$0xf]
    %v414 = vld [vmem:[%s4 + $0x8] sm:$0xf]
    %v415 = vld [vmem:[%s4 + $0xc] sm:$0xf]
    %v416 = vld [vmem:[%s4 + $0x10] sm:$0xf]
    %v417 = vld [vmem:[%s4 + $0x14] sm:$0xf]
    %v418 = vld [vmem:[%s4 + $0x18] sm:$0xf]
    %v419 = vld [vmem:[%s4 + $0x1c] sm:$0xf]
    %v420 = vld [vmem:[%s5 + $0x3] sm:$0x1]
    %v421 = vlaneseq
    %v422 = vshrl.u32 %v421, 7
    %v423 = vsub.s32 0, %v422
    %v424 = vrot.slane %v420, %v423
    %v433 = vunpack.c.l.b16 %v412
    %v434 = vunpack.c.l.b16 %v413
    %v435 = vunpack.c.l.b16 %v414
    %v436 = vunpack.c.l.b16 %v415
    %v437 = vunpack.c.l.b16 %v416
    %v438 = vunpack.c.l.b16 %v417
    %v439 = vunpack.c.l.b16 %v418
    %v440 = vunpack.c.l.b16 %v419
    %v441 = vpack.c.b16 %v434, %v433
    %v442 = vpack.c.b16 %v436, %v435
    %v443 = vpack.c.b16 %v438, %v437
    %v444 = vpack.c.b16 %v440, %v439
    %vm449 = vcmask 523264
    %v451 = vsel %vm449, %v411, 0
    %453 = vmatprep.subr.bf16.mxu0 0
    %454 = vmatpush1.bf16.msra.mxu0 %v441
    %455 = vmatprep.subr.bf16.mxu0 0
    %456 = vmatpush1.bf16.msra.mxu0 %v442
    %457 = vmatprep.subr.bf16.mxu0 0
    %458 = vmatpush1.bf16.msra.mxu0 %v443
    %459 = vmatprep.subr.bf16.mxu0 0
    %460 = vmatpush1.bf16.msra.mxu0 %v444
    %461 = vmatprep.subr.bf16.mxu0 0
    %462 = vmatpush1.bf16.msra.mxu0 0
    %463 = vmatprep.subr.bf16.mxu0 0
    %464 = vmatpush1.bf16.msra.mxu0 0
    %465 = vmatprep.subr.bf16.mxu0 0
    %466 = vmatpush1.bf16.msra.mxu0 0
    %467 = vmatprep.subr.bf16.mxu0 0
    %468 = vmatpush1.bf16.msra.mxu0 0
    %469 = vmatprep.subr.bf16.mxu0 0
    %470 = vmatpush1.bf16.msra.mxu0 0
    %471 = vmatprep.subr.bf16.mxu0 0
    %472 = vmatpush1.bf16.msra.mxu0 0
    %473 = vmatprep.subr.bf16.mxu0 0
    %474 = vmatpush1.bf16.msra.mxu0 0
    %475 = vmatprep.subr.bf16.mxu0 0
    %476 = vmatpush1.bf16.msra.mxu0 0
    %477 = vmatprep.subr.bf16.mxu0 0
    %478 = vmatpush1.bf16.msra.mxu0 0
    %479 = vmatprep.subr.bf16.mxu0 0
    %480 = vmatpush1.bf16.msra.mxu0 0
    %481 = vmatprep.subr.bf16.mxu0 0
    %482 = vmatpush1.bf16.msra.mxu0 0
    %483 = vmatprep.subr.bf16.mxu0 0
    %484 = vmatpush1.bf16.msra.mxu0 0
    %485 = vmatprep.mubr.bf16.mxu0 0
    %486 = vmatmul.mubr.bf16.gmra.mrb[0].mxu0 %v451
    %v487 = vpop.f32.mrb[0].mxu0
    %v488 = vadd.f32 %v424, %v487
    %v489 = vpop.f32.mrb[0].mxu0
    %v490 = vpop.f32.mrb[0].mxu0
    %v491 = vpop.f32.mrb[0].mxu0
    %492 = vdwg.mxu0
    %vm493 = vcmask 130048
    %494 = vst.msk [vmem:[#allocation5] sm:$0xff] %vm493, %v488
    // Predicated region
    $region30: #{tpu_custom_call.1} parent=1 // pred_check
      _
    $region31: #{tpu_custom_call.1} parent=1 // pred_check_branch
      %496 = sbr.rel (0) target = $region33
    $region32: #{tpu_custom_call.1} parent=1 // pred_region
      %s498 = ssub.s32 128, 128
      %499 = vsyncadd [#allocation4], %s498
      %s501 = sshll.u32 [#allocation5], 4
      %s502 = int_to_ptr.vmem [resolvable:$true] %s501
      %504 = dma.vmem_to_hbm [thread:$0]  %s502, 128, %s6, [#allocation4]
    $region33: #{tpu_custom_call.1} parent=1 // pred_fallthru
      _
    // Predicated region
    $region34: #{tpu_custom_call.1} parent=1 // pred_check
      _
    $region35: #{tpu_custom_call.1} parent=1 // pred_check_branch
      %506 = sbr.rel (0) target = $region37
    $region36: #{tpu_custom_call.1} parent=1 // pred_region
      %507 = dma.done [#allocation4], 128
    $region37: #{tpu_custom_call.1} parent=1 // pred_fallthru
      _
    %508 = vsyncpa [#allocation3], 1
    %509 = vsyncpa [#allocation4], 1

</llo_original>
